<compile_context>
chip_gen: v5e
topology: v5e:2x2
jax: 0.10.0
libtpu: 0.0.40
codegen_flags: <defaults>
</compile_context>

<pallas_src>
import jax
import jax.numpy as jnp
from jax import lax
from jax.experimental import pallas as pl
from jax.experimental.pallas import tpu as pltpu


def _attention_kernel(x_ref, w1_ref, b1_ref, w2_ref, b2_ref, o_ref, z_ref):
    """One grid step == one row tile of the (N, N) attention matrix.

    x_ref  : VMEM (N, Din)    resident input
    w1_ref : VMEM (Din, Dh)   first Linear weight (in, out)
    b1_ref : VMEM (1, Dh)     first Linear bias
    w2_ref : VMEM (Dh, Dout)  second Linear weight (in, out)
    b2_ref : VMEM (1, Dout)   second Linear bias
    o_ref  : VMEM (TM, N)     output row tile of softmax(Z @ Z.T, axis=1)
    z_ref  : VMEM (N, Dout)   scratch: full Z, computed once at grid step 0
    """
    i = pl.program_id(0)
    tm = o_ref.shape[0]

    # Step 0: compute the full MLP output Z into VMEM scratch (reused by all tiles).
    @pl.when(i == 0)
    def _compute_z():
        h = jnp.dot(x_ref[...], w1_ref[...],
                    preferred_element_type=jnp.float32) + b1_ref[...]
        h = jnp.maximum(h, 0.0)                                   # ReLU
        z = jnp.dot(h, w2_ref[...],
                    preferred_element_type=jnp.float32) + b2_ref[...]
        z_ref[...] = z                                            # no ReLU after 2nd Linear

    # score tile = Z[rows] @ Z.T, contracting the feature dim (no explicit transpose).
    row0 = pl.multiple_of(i * tm, tm)
    z_rows = z_ref[pl.ds(row0, tm), :]
    s = lax.dot_general(z_rows, z_ref[...],
                        dimension_numbers=(((1,), (1,)), ((), ())),
                        preferred_element_type=jnp.float32)       # (TM, N)

    # Row-wise softmax (numerically stable).
    m = jnp.max(s, axis=1, keepdims=True)
    p = jnp.exp(s - m)
    denom = jnp.sum(p, axis=1, keepdims=True)
    o_ref[...] = p / denom


def attention_layer(x, w1, b1, w2, b2, *, row_tile=128):
    """x: (N, Din); w1: (Din, Dh); b1: (1, Dh); w2: (Dh, Dout); b2: (1, Dout).

    Returns softmax(Z @ Z.T, axis=1) with Z = relu(x @ w1 + b1) @ w2 + b2, shape (N, N).
    """
    x = x.astype(jnp.float32)                 # mirrors the torch.float64 -> float() cast
    N, Din = x.shape
    Dh = w1.shape[1]
    Dout = w2.shape[1]
    assert N % row_tile == 0, "N must be a multiple of row_tile"
    assert N % 128 == 0, "N should be lane-aligned (multiple of 128)"

    grid_spec = pltpu.PrefetchScalarGridSpec(
        num_scalar_prefetch=0,
        grid=(N // row_tile,),
        in_specs=[
            pl.BlockSpec((N, Din), lambda i: (0, 0)),     # x       (resident)
            pl.BlockSpec((Din, Dh), lambda i: (0, 0)),    # w1      (resident)
            pl.BlockSpec((1, Dh), lambda i: (0, 0)),      # b1      (resident)
            pl.BlockSpec((Dh, Dout), lambda i: (0, 0)),   # w2      (resident)
            pl.BlockSpec((1, Dout), lambda i: (0, 0)),    # b2      (resident)
        ],
        out_specs=pl.BlockSpec((row_tile, N), lambda i: (i, 0)),   # lane-dense row tile
        scratch_shapes=[pltpu.VMEM((N, Dout), jnp.float32)],        # full Z
    )

    return pl.pallas_call(
        _attention_kernel,
        out_shape=jax.ShapeDtypeStruct((N, N), jnp.float32),
        grid_spec=grid_spec,
        compiler_params=pltpu.CompilerParams(
            # "arbitrary": later row tiles read the Z scratch written at step 0.
            dimension_semantics=("arbitrary",),
        ),
    )(x, w1, b1, w2, b2)


def reference_forward(x, w1, b1, w2, b2):
    """Pure-JAX mirror of the PyTorch forward (float32)."""
    x = x.astype(jnp.float32)
    h = jnp.maximum(x @ w1 + b1, 0.0)
    z = h @ w2 + b2
    s = z @ z.T
    return jax.nn.softmax(s, axis=1)


if __name__ == "__main__":
    # Small shapes consistent with the module: N nodes, in=64, hid=128, out=64.
    N, Din, Dh, Dout = 256, 64, 128, 64

    key = jax.random.PRNGKey(0)
    kx, k1, kb1, k2, kb2 = jax.random.split(key, 5)
    x = jax.random.normal(kx, (N, Din), dtype=jnp.float32)
    w1 = jax.random.normal(k1, (Din, Dh), dtype=jnp.float32) * 0.05
    b1 = jax.random.normal(kb1, (1, Dh), dtype=jnp.float32) * 0.05
    w2 = jax.random.normal(k2, (Dh, Dout), dtype=jnp.float32) * 0.05
    b2 = jax.random.normal(kb2, (1, Dout), dtype=jnp.float32) * 0.05

    out = attention_layer(x, w1, b1, w2, b2, row_tile=128)
    out = jax.block_until_ready(out)

    expected = reference_forward(x, w1, b1, w2, b2)
    assert out.shape == (N, N), out.shape
    assert jnp.allclose(out, expected, atol=5e-4, rtol=1e-2), "mismatch vs reference"
    assert jnp.allclose(out.sum(axis=1), 1.0, atol=1e-4), "softmax rows must sum to 1"

    print("KERNEL_OK")
</pallas_src>

<mosaic_0001>
module attributes {stable_mosaic.version = 11 : i64} {
  func.func @_attention_kernel(%arg0: i32, %arg1: memref<256x64xf32, #tpu.memory_space<vmem>>, %arg2: memref<64x128xf32, #tpu.memory_space<vmem>>, %arg3: memref<1x128xf32, #tpu.memory_space<vmem>>, %arg4: memref<128x64xf32, #tpu.memory_space<vmem>>, %arg5: memref<1x64xf32, #tpu.memory_space<vmem>>, %arg6: memref<128x256xf32, #tpu.memory_space<vmem>>, %arg7: memref<256x64xf32, #tpu.memory_space<vmem>>) attributes {dimension_semantics = [#tpu.dimension_semantics<arbitrary>], iteration_bounds = array<i64: 2>, scalar_prefetch = 0 : i64, scratch_operands = 1 : i64, tpu.core_type = #tpu.core_type<tc>, window_params = [{pipeline_mode = #tpu.pipeline_mode<synchronous>, transform_indices = @transform_0, window_bounds = array<i64: 256, 64>}, {pipeline_mode = #tpu.pipeline_mode<synchronous>, transform_indices = @transform_1, window_bounds = array<i64: 64, 128>}, {pipeline_mode = #tpu.pipeline_mode<synchronous>, transform_indices = @transform_2, window_bounds = array<i64: 1, 128>}, {pipeline_mode = #tpu.pipeline_mode<synchronous>, transform_indices = @transform_3, window_bounds = array<i64: 128, 64>}, {pipeline_mode = #tpu.pipeline_mode<synchronous>, transform_indices = @transform_4, window_bounds = array<i64: 1, 64>}, {transform_indices = @transform_5, window_bounds = array<i64: 128, 256>}]} {
    %c0_i32 = arith.constant 0 : i32
    %0 = arith.cmpi eq, %arg0, %c0_i32 : i32
    %1 = arith.extui %0 : i1 to i32
    %c0_i32_0 = arith.constant 0 : i32
    %2 = arith.cmpi ne, %1, %c0_i32_0 : i32
    scf.if %2 {
      %c0_7 = arith.constant 0 : index
      %c0_8 = arith.constant 0 : index
      %19 = vector.load %arg1[%c0_7, %c0_8] : memref<256x64xf32, #tpu.memory_space<vmem>>, vector<256x64xf32>
      %c0_9 = arith.constant 0 : index
      %c0_10 = arith.constant 0 : index
      %20 = vector.load %arg2[%c0_9, %c0_10] : memref<64x128xf32, #tpu.memory_space<vmem>>, vector<64x128xf32>
      %cst_11 = arith.constant dense<0.000000e+00> : vector<256x128xf32>
      %21 = tpu.matmul %19, %20, %cst_11 {dimension_numbers = #tpu.dot_dimension_numbers<[1], [0], [0], [1], [0, 0, 1, 1], [], []>} : vector<256x64xf32>, vector<64x128xf32>, vector<256x128xf32> -> vector<256x128xf32>
      %c0_12 = arith.constant 0 : index
      %c0_13 = arith.constant 0 : index
      %22 = vector.load %arg3[%c0_12, %c0_13] : memref<1x128xf32, #tpu.memory_space<vmem>>, vector<1x128xf32>
      %23 = vector.broadcast %22 : vector<1x128xf32> to vector<256x128xf32>
      %24 = arith.addf %21, %23 : vector<256x128xf32>
      %cst_14 = arith.constant 0.000000e+00 : f32
      %25 = vector.broadcast %cst_14 : f32 to vector<256x128xf32>
      %26 = arith.maximumf %24, %25 : vector<256x128xf32>
      %c0_15 = arith.constant 0 : index
      %c0_16 = arith.constant 0 : index
      %27 = vector.load %arg4[%c0_15, %c0_16] : memref<128x64xf32, #tpu.memory_space<vmem>>, vector<128x64xf32>
      %cst_17 = arith.constant dense<0.000000e+00> : vector<256x64xf32>
      %28 = tpu.matmul %26, %27, %cst_17 {dimension_numbers = #tpu.dot_dimension_numbers<[1], [0], [0], [1], [0, 0, 1, 1], [], []>} : vector<256x128xf32>, vector<128x64xf32>, vector<256x64xf32> -> vector<256x64xf32>
      %c0_18 = arith.constant 0 : index
      %c0_19 = arith.constant 0 : index
      %29 = vector.load %arg5[%c0_18, %c0_19] : memref<1x64xf32, #tpu.memory_space<vmem>>, vector<1x64xf32>
      %30 = vector.broadcast %29 : vector<1x64xf32> to vector<256x64xf32>
      %31 = arith.addf %28, %30 : vector<256x64xf32>
      %c0_20 = arith.constant 0 : index
      %c0_21 = arith.constant 0 : index
      %32 = vector.load %arg7[%c0_20, %c0_21] : memref<256x64xf32, #tpu.memory_space<vmem>>, vector<256x64xf32>
      tpu.vector_store %arg7[%c0_20, %c0_21], %31 {strides = array<i32>} : memref<256x64xf32, #tpu.memory_space<vmem>>, vector<256x64xf32>,
    } else {
    }
    %c128_i32 = arith.constant 128 : i32
    %3 = arith.muli %arg0, %c128_i32 : i32
    %4 = tpu.assume_multiple %3, 128 : i32
    %5 = arith.index_cast %4 : i32 to index
    %c0 = arith.constant 0 : index
    %6 = vector.load %arg7[%5, %c0] : memref<256x64xf32, #tpu.memory_space<vmem>>, vector<128x64xf32>
    %c0_1 = arith.constant 0 : index
    %c0_2 = arith.constant 0 : index
    %7 = vector.load %arg7[%c0_1, %c0_2] : memref<256x64xf32, #tpu.memory_space<vmem>>, vector<256x64xf32>
    %cst = arith.constant dense<0.000000e+00> : vector<128x256xf32>
    %8 = tpu.matmul %6, %7, %cst {dimension_numbers = #tpu.dot_dimension_numbers<[1], [1], [0], [0], [0, 0, 1, 0], [], []>} : vector<128x64xf32>, vector<256x64xf32>, vector<128x256xf32> -> vector<128x256xf32>
    %cst_3 = arith.constant dense<0xFF800000> : vector<128xf32>
    %9 = vector.multi_reduction <maximumf>, %8, %cst_3 [1] : vector<128x256xf32> to vector<128xf32>
    %10 = vector.shape_cast %9 : vector<128xf32> to vector<128x1xf32>
    %11 = vector.broadcast %10 : vector<128x1xf32> to vector<128x256xf32>
    %12 = arith.subf %8, %11 : vector<128x256xf32>
    %13 = math.exp %12 : vector<128x256xf32>
    %cst_4 = arith.constant dense<0.000000e+00> : vector<128xf32>
    %14 = vector.multi_reduction <add>, %13, %cst_4 [1] : vector<128x256xf32> to vector<128xf32>
    %15 = vector.shape_cast %14 : vector<128xf32> to vector<128x1xf32>
    %16 = vector.broadcast %15 : vector<128x1xf32> to vector<128x256xf32>
    %17 = arith.divf %13, %16 : vector<128x256xf32>
    %c0_5 = arith.constant 0 : index
    %c0_6 = arith.constant 0 : index
    %18 = vector.load %arg6[%c0_5, %c0_6] : memref<128x256xf32, #tpu.memory_space<vmem>>, vector<128x256xf32>
    tpu.vector_store %arg6[%c0_5, %c0_6], %17 {strides = array<i32>} : memref<128x256xf32, #tpu.memory_space<vmem>>, vector<128x256xf32>,
    return
  }
  func.func @transform_0(%arg0: i32) -> (i32, i32) {
    %c0_i32 = arith.constant 0 : i32
    %c0_i32_0 = arith.constant 0 : i32
    %c0_i32_1 = arith.constant 0 : i32
    return %c0_i32, %c0_i32_0 : i32, i32
  }
  func.func @transform_1(%arg0: i32) -> (i32, i32) {
    %c0_i32 = arith.constant 0 : i32
    %c0_i32_0 = arith.constant 0 : i32
    %c0_i32_1 = arith.constant 0 : i32
    return %c0_i32, %c0_i32_0 : i32, i32
  }
  func.func @transform_2(%arg0: i32) -> (i32, i32) {
    %c0_i32 = arith.constant 0 : i32
    %c0_i32_0 = arith.constant 0 : i32
    %c0_i32_1 = arith.constant 0 : i32
    return %c0_i32, %c0_i32_0 : i32, i32
  }
  func.func @transform_3(%arg0: i32) -> (i32, i32) {
    %c0_i32 = arith.constant 0 : i32
    %c0_i32_0 = arith.constant 0 : i32
    %c0_i32_1 = arith.constant 0 : i32
    return %c0_i32, %c0_i32_0 : i32, i32
  }
  func.func @transform_4(%arg0: i32) -> (i32, i32) {
    %c0_i32 = arith.constant 0 : i32
    %c0_i32_0 = arith.constant 0 : i32
    %c0_i32_1 = arith.constant 0 : i32
    return %c0_i32, %c0_i32_0 : i32, i32
  }
  func.func @transform_5(%arg0: i32) -> (i32, i32) {
    %c0_i32 = arith.constant 0 : i32
    %c0_i32_0 = arith.constant 0 : i32
    return %arg0, %c0_i32 : i32, i32
  }
}

</mosaic_0001>

<llo_original>
// kernel: tpu_custom_call.1
$region0: #{tpu_custom_call.1}
  #allocation0 [shape = 'u32[]', space=smem, size = 0x4, offset = 0x4, fixed_abs, tag = 'smem constant byte address 0x4 - core index']
  #allocation1 [shape = 'u32[72,128]{1,0:T(1,128)}', space=vmem, size = 0x9000, scoped, tag = 'internal scratch']
  #allocation2 [shape = 'f32[256,64]{1,0:T(8,128)}', space=vmem, size = 0x20000, scoped, tag = 'scratch operand']
  %s0 = inlined_call_operand.vmem [shape: f32[256,64], index: 0, kind: input, shape index: {}]
  %s1 = inlined_call_operand.vmem [shape: f32[64,128], index: 1, kind: input, shape index: {}]
  %s2 = inlined_call_operand.vmem [shape: f32[1,128], index: 2, kind: input, shape index: {}]
  %s3 = inlined_call_operand.vmem [shape: f32[128,64], index: 3, kind: input, shape index: {}]
  %s4 = inlined_call_operand.vmem [shape: f32[1,64], index: 4, kind: input, shape index: {}]
  %s5 = inlined_call_operand.hbm [shape: f32[256,256], index: 5, kind: output, shape index: {}]
  %s6 = sld [smem:[#allocation0]]
  $region57: #{tpu_custom_call.1} parent=0
    _
  %s8 = ssub.s32 1, %s6
  %s9 = scalar_select 0, %s8, %s6
  $region1: #{tpu_custom_call.1} parent=0
    #allocation3 [shape = 'u8[262144]{0}', space=vmem, size = 0x40000, scoped, tag = 'output window, operand 0']
    #allocation4 [shape = 's32[2]{0}', space=sflag, size = 0x8, scoped, tag = 'scoped memory for tpu_custom_call.1']
    %10 = vsyncpa [#allocation4], 0
    %s11 = scalar_lea.sflag [#allocation4], 1
    %12 = vsyncpa %s11, 0
    loop: start=0, step=1, limit=4
    $region2: #{tpu_custom_call.1} parent=1 // loop_pre_header
      _
    $region3: #{tpu_custom_call.1} parent=1 // loop_header
      %s14 = sphi 0, %s18
      %p15 = scmp.ge.s32.totalorder %s14, 4
      %s22 = sphi 0, %s22
      %s24 = sphi 0, %s22
      %s25 = sphi 0, %s24
      %s39 = sphi 0, %s25
      %s43 = sphi 0, %s43
      %s45 = sphi 0, %s43
      %s46 = sphi 0, %s45
      %s60 = sphi 0, %s46
      %s64 = sphi 0, %s64
      %s66 = sphi 0, %s64
      %s67 = sphi 0, %s66
      %s81 = sphi 0, %s67
      %s85 = sphi 0, %s85
      %s87 = sphi 0, %s85
      %s88 = sphi 0, %s87
      %s102 = sphi 0, %s88
      %s106 = sphi 0, %s106
      %s108 = sphi 0, %s106
      %s109 = sphi 0, %s108
      %s123 = sphi 0, %s109
      %s129 = sphi 0, %s131
      %s132 = sphi 0, %s129
      %s133 = sphi 0, %s132
      %s149 = sphi 0, %s133
    $region4: #{tpu_custom_call.1} parent=1 // loop_header_branch
      %17 = sbr.rel (%p15) target = $region8
    $region5: #{tpu_custom_call.1} parent=1 // loop_body
      %s19 = ssub.s32 %s14, 1
      %s20 = ssub.s32 %s14, 2
      %s21 = sadd.s32 %s14, 1
      %s23 = sadd.s32 %s22, 1
      %p26 = scmp.eq.s32.totalorder %s14, 1
      %p27 = scmp.ne.s32.totalorder %s22, %s24
      %p28 = scmp.eq.s32.totalorder %s14, 0
      %p29 = por %p27, %p28
      %p30 = scmp.ne.s32.totalorder %s22, %s24
      %p31 = scmp.eq.s32.totalorder %s19, 1
      %p32 = por %p30, %p31
      %p33 = scmp.ne.s32.totalorder %s24, %s25
      %p34 = scmp.eq.s32.totalorder %s19, 0
      %p35 = por %p33, %p34
      %p36 = scmp.ne.s32.totalorder %s24, %s25
      %p37 = scmp.eq.s32.totalorder %s20, 1
      %p38 = por %p36, %p37
      %p40 = scmp.ne.s32.totalorder %s25, %s39
      %p41 = scmp.eq.s32.totalorder %s20, 0
      %p42 = por %p40, %p41
      %s44 = sadd.s32 %s43, 1
      %p47 = scmp.eq.s32.totalorder %s14, 1
      %p48 = scmp.ne.s32.totalorder %s43, %s45
      %p49 = scmp.eq.s32.totalorder %s14, 0
      %p50 = por %p48, %p49
      %p51 = scmp.ne.s32.totalorder %s43, %s45
      %p52 = scmp.eq.s32.totalorder %s19, 1
      %p53 = por %p51, %p52
      %p54 = scmp.ne.s32.totalorder %s45, %s46
      %p55 = scmp.eq.s32.totalorder %s19, 0
      %p56 = por %p54, %p55
      %p57 = scmp.ne.s32.totalorder %s45, %s46
      %p58 = scmp.eq.s32.totalorder %s20, 1
      %p59 = por %p57, %p58
      %p61 = scmp.ne.s32.totalorder %s46, %s60
      %p62 = scmp.eq.s32.totalorder %s20, 0
      %p63 = por %p61, %p62
      %s65 = sadd.s32 %s64, 1
      %p68 = scmp.eq.s32.totalorder %s14, 1
      %p69 = scmp.ne.s32.totalorder %s64, %s66
      %p70 = scmp.eq.s32.totalorder %s14, 0
      %p71 = por %p69, %p70
      %p72 = scmp.ne.s32.totalorder %s64, %s66
      %p73 = scmp.eq.s32.totalorder %s19, 1
      %p74 = por %p72, %p73
      %p75 = scmp.ne.s32.totalorder %s66, %s67
      %p76 = scmp.eq.s32.totalorder %s19, 0
      %p77 = por %p75, %p76
      %p78 = scmp.ne.s32.totalorder %s66, %s67
      %p79 = scmp.eq.s32.totalorder %s20, 1
      %p80 = por %p78, %p79
      %p82 = scmp.ne.s32.totalorder %s67, %s81
      %p83 = scmp.eq.s32.totalorder %s20, 0
      %p84 = por %p82, %p83
      %s86 = sadd.s32 %s85, 1
      %p89 = scmp.eq.s32.totalorder %s14, 1
      %p90 = scmp.ne.s32.totalorder %s85, %s87
      %p91 = scmp.eq.s32.totalorder %s14, 0
      %p92 = por %p90, %p91
      %p93 = scmp.ne.s32.totalorder %s85, %s87
      %p94 = scmp.eq.s32.totalorder %s19, 1
      %p95 = por %p93, %p94
      %p96 = scmp.ne.s32.totalorder %s87, %s88
      %p97 = scmp.eq.s32.totalorder %s19, 0
      %p98 = por %p96, %p97
      %p99 = scmp.ne.s32.totalorder %s87, %s88
      %p100 = scmp.eq.s32.totalorder %s20, 1
      %p101 = por %p99, %p100
      %p103 = scmp.ne.s32.totalorder %s88, %s102
      %p104 = scmp.eq.s32.totalorder %s20, 0
      %p105 = por %p103, %p104
      %s107 = sadd.s32 %s106, 1
      %p110 = scmp.eq.s32.totalorder %s14, 1
      %p111 = scmp.ne.s32.totalorder %s106, %s108
      %p112 = scmp.eq.s32.totalorder %s14, 0
      %p113 = por %p111, %p112
      %p114 = scmp.ne.s32.totalorder %s106, %s108
      %p115 = scmp.eq.s32.totalorder %s19, 1
      %p116 = por %p114, %p115
      %p117 = scmp.ne.s32.totalorder %s108, %s109
      %p118 = scmp.eq.s32.totalorder %s19, 0
      %p119 = por %p117, %p118
      %p120 = scmp.ne.s32.totalorder %s108, %s109
      %p121 = scmp.eq.s32.totalorder %s20, 1
      %p122 = por %p120, %p121
      %p124 = scmp.ne.s32.totalorder %s109, %s123
      %p125 = scmp.eq.s32.totalorder %s20, 0
      %p126 = por %p124, %p125
      %s127 = ssub.s32 %s14, %s21
      %p128 = scmp.eq.s32.totalorder %s127, 0
      %s130 = sadd.s32 %s129, 1
      %s131 = scalar_select %p128, %s129, %s130
      %p134 = pneg %p128
      %p135 = scmp.eq.s32.totalorder %s14, 1
      %p136 = por %p134, %p135
      %p137 = scmp.ne.s32.totalorder %s129, %s132
      %p138 = scmp.eq.s32.totalorder %s14, 0
      %p139 = por %p137, %p138
      %p140 = scmp.ne.s32.totalorder %s129, %s132
      %p141 = scmp.eq.s32.totalorder %s19, 1
      %p142 = por %p140, %p141
      %p143 = scmp.ne.s32.totalorder %s132, %s133
      %p144 = scmp.eq.s32.totalorder %s19, 0
      %p145 = por %p143, %p144
      %p146 = scmp.ne.s32.totalorder %s132, %s133
      %p147 = scmp.eq.s32.totalorder %s20, 1
      %p148 = por %p146, %p147
      %p150 = scmp.ne.s32.totalorder %s133, %s149
      %p151 = scmp.eq.s32.totalorder %s20, 0
      %p152 = por %p150, %p151
      %p153 = scmp.le.s32.totalorder 1, %s14
      %p154 = scmp.lt.s32.totalorder %s14, 3
      %p155 = pnand %p153, %p154
      %p156 = pneg %p155
      // Predicated region
      $region9: #{tpu_custom_call.1} parent=5 // pred_check
        _
      $region10: #{tpu_custom_call.1} parent=5 // pred_check_branch
        %158 = sbr.rel (%p155) target = $region12
      $region11: #{tpu_custom_call.1} parent=5 // pred_region
        %s159 = ssub.s32 %s14, 1
        // Predicated region
        $region13: #{tpu_custom_call.1} parent=11 // pred_check
          %p160 = pneg %p35
        $region14: #{tpu_custom_call.1} parent=11 // pred_check_branch
          %162 = sbr.rel (%p160) target = $region16
        $region15: #{tpu_custom_call.1} parent=11 // pred_region
          _
        $region16: #{tpu_custom_call.1} parent=11 // pred_fallthru
          _
        // Predicated region
        $region17: #{tpu_custom_call.1} parent=11 // pred_check
          %p163 = pneg %p56
        $region18: #{tpu_custom_call.1} parent=11 // pred_check_branch
          %165 = sbr.rel (%p163) target = $region20
        $region19: #{tpu_custom_call.1} parent=11 // pred_region
          _
        $region20: #{tpu_custom_call.1} parent=11 // pred_fallthru
          _
        // Predicated region
        $region21: #{tpu_custom_call.1} parent=11 // pred_check
          %p166 = pneg %p77
        $region22: #{tpu_custom_call.1} parent=11 // pred_check_branch
          %168 = sbr.rel (%p166) target = $region24
        $region23: #{tpu_custom_call.1} parent=11 // pred_region
          _
        $region24: #{tpu_custom_call.1} parent=11 // pred_fallthru
          _
        // Predicated region
        $region25: #{tpu_custom_call.1} parent=11 // pred_check
          %p169 = pneg %p98
        $region26: #{tpu_custom_call.1} parent=11 // pred_check_branch
          %171 = sbr.rel (%p169) target = $region28
        $region27: #{tpu_custom_call.1} parent=11 // pred_region
          _
        $region28: #{tpu_custom_call.1} parent=11 // pred_fallthru
          _
        // Predicated region
        $region29: #{tpu_custom_call.1} parent=11 // pred_check
          %p172 = pneg %p119
        $region30: #{tpu_custom_call.1} parent=11 // pred_check_branch
          %174 = sbr.rel (%p172) target = $region32
        $region31: #{tpu_custom_call.1} parent=11 // pred_region
          _
        $region32: #{tpu_custom_call.1} parent=11 // pred_fallthru
          _
      $region12: #{tpu_custom_call.1} parent=5 // pred_fallthru
        _
      %p175 = scmp.lt.s32.totalorder %s14, 2
      // Predicated region
      $region33: #{tpu_custom_call.1} parent=5 // pred_check
        %p176 = pneg %p175
      $region34: #{tpu_custom_call.1} parent=5 // pred_check_branch
        %178 = sbr.rel (%p176) target = $region36
      $region35: #{tpu_custom_call.1} parent=5 // pred_region
        _
      $region36: #{tpu_custom_call.1} parent=5 // pred_fallthru
        _
      %p179 = scmp.le.s32.totalorder 1, %s14
      %p180 = scmp.lt.s32.totalorder %s14, 3
      %p181 = pnand %p179, %p180
      %p182 = pneg %p181
      // Predicated region
      $region37: #{tpu_custom_call.1} parent=5 // pred_check
        _
      $region38: #{tpu_custom_call.1} parent=5 // pred_check_branch
        %184 = sbr.rel (%p181) target = $region40
      $region39: #{tpu_custom_call.1} parent=5 // pred_region
        %s185 = ssub.s32 %s14, 1
        %p186 = pneg %p35
        %p187 = pneg %p32
        %p188 = pneg %p56
        %p189 = pneg %p53
        %p190 = pneg %p77
        %p191 = pneg %p74
        %p192 = pneg %p98
        %p193 = pneg %p95
        %p194 = pneg %p119
        %p195 = pneg %p116
        %p196 = pneg %p145
        %p197 = pneg %p142
        %s198 = sand.u32 %s132, 1
        %s199 = scalar_lea.sflag [#allocation4], %s198
        %s200 = sand.u32 %s132, 1
        %s201 = smul.addr %s200, 256
        %s202 = scalar_lea.vmem [#allocation3], %s201
        %s203 = smul.u32 16, %s19
        %p204 = scmp.eq.s32.totalorder %s19, 0
        // Predicated region
        $region41: #{tpu_custom_call.1} parent=39 // pred_check
          %p205 = pneg %p204
        $region42: #{tpu_custom_call.1} parent=39 // pred_check_branch
          %207 = sbr.rel (%p205) target = $region44
        $region43: #{tpu_custom_call.1} parent=39 // pred_region
          %v208 = vld [vmem:[%s0] sm:$0xff]
          %v209 = vld [vmem:[%s0 + $0x8] sm:$0xff]
          %v210 = vld [vmem:[%s0 + $0x10] sm:$0xff]
          %v211 = vld [vmem:[%s0 + $0x18] sm:$0xff]
          %v212 = vld [vmem:[%s0 + $0x20] sm:$0xff]
          %v213 = vld [vmem:[%s0 + $0x28] sm:$0xff]
          %v214 = vld [vmem:[%s0 + $0x30] sm:$0xff]
          %v215 = vld [vmem:[%s0 + $0x38] sm:$0xff]
          %v216 = vld [vmem:[%s0 + $0x40] sm:$0xff]
          %v217 = vld [vmem:[%s0 + $0x48] sm:$0xff]
          %v218 = vld [vmem:[%s0 + $0x50] sm:$0xff]
          %v219 = vld [vmem:[%s0 + $0x58] sm:$0xff]
          %v220 = vld [vmem:[%s0 + $0x60] sm:$0xff]
          %v221 = vld [vmem:[%s0 + $0x68] sm:$0xff]
          %v222 = vld [vmem:[%s0 + $0x70] sm:$0xff]
          %v223 = vld [vmem:[%s0 + $0x78] sm:$0xff]
          %v224 = vld [vmem:[%s0 + $0x80] sm:$0xff]
          %v225 = vld [vmem:[%s0 + $0x88] sm:$0xff]
          %v226 = vld [vmem:[%s0 + $0x90] sm:$0xff]
          %v227 = vld [vmem:[%s0 + $0x98] sm:$0xff]
          %v228 = vld [vmem:[%s0 + $0xa0] sm:$0xff]
          %v229 = vld [vmem:[%s0 + $0xa8] sm:$0xff]
          %v230 = vld [vmem:[%s0 + $0xb0] sm:$0xff]
          %v231 = vld [vmem:[%s0 + $0xb8] sm:$0xff]
          %v232 = vld [vmem:[%s0 + $0xc0] sm:$0xff]
          %v233 = vld [vmem:[%s0 + $0xc8] sm:$0xff]
          %v234 = vld [vmem:[%s0 + $0xd0] sm:$0xff]
          %v235 = vld [vmem:[%s0 + $0xd8] sm:$0xff]
          %v236 = vld [vmem:[%s0 + $0xe0] sm:$0xff]
          %v237 = vld [vmem:[%s0 + $0xe8] sm:$0xff]
          %v238 = vld [vmem:[%s0 + $0xf0] sm:$0xff]
          %v239 = vld [vmem:[%s0 + $0xf8] sm:$0xff]
          %v240 = vld [vmem:[%s1] sm:$0xff]
          %v241 = vld [vmem:[%s1 + $0x8] sm:$0xff]
          %v242 = vld [vmem:[%s1 + $0x10] sm:$0xff]
          %v243 = vld [vmem:[%s1 + $0x18] sm:$0xff]
          %v244 = vld [vmem:[%s1 + $0x20] sm:$0xff]
          %v245 = vld [vmem:[%s1 + $0x28] sm:$0xff]
          %v246 = vld [vmem:[%s1 + $0x30] sm:$0xff]
          %v247 = vld [vmem:[%s1 + $0x38] sm:$0xff]
          %v248 = vld [vmem:[%s2] sm:$0x1]
          %v250 = vperm.slane %v248, 0
          %vm252 = vcmask 523264
          %v254 = vsel %vm252, %v208, 0
          %v257 = vsel %vm252, %v209, 0
          %v260 = vsel %vm252, %v210, 0
          %v263 = vsel %vm252, %v211, 0
          %v266 = vsel %vm252, %v212, 0
          %v269 = vsel %vm252, %v213, 0
          %v272 = vsel %vm252, %v214, 0
          %v275 = vsel %vm252, %v215, 0
          %v278 = vsel %vm252, %v216, 0
          %v281 = vsel %vm252, %v217, 0
          %v284 = vsel %vm252, %v218, 0
          %v287 = vsel %vm252, %v219, 0
          %v290 = vsel %vm252, %v220, 0
          %v293 = vsel %vm252, %v221, 0
          %v296 = vsel %vm252, %v222, 0
          %v299 = vsel %vm252, %v223, 0
          %v302 = vsel %vm252, %v224, 0
          %v305 = vsel %vm252, %v225, 0
          %v308 = vsel %vm252, %v226, 0
          %v311 = vsel %vm252, %v227, 0
          %v314 = vsel %vm252, %v228, 0
          %v317 = vsel %vm252, %v229, 0
          %v320 = vsel %vm252, %v230, 0
          %v323 = vsel %vm252, %v231, 0
          %v326 = vsel %vm252, %v232, 0
          %v329 = vsel %vm252, %v233, 0
          %v332 = vsel %vm252, %v234, 0
          %v335 = vsel %vm252, %v235, 0
          %v338 = vsel %vm252, %v236, 0
          %v341 = vsel %vm252, %v237, 0
          %v344 = vsel %vm252, %v238, 0
          %v347 = vsel %vm252, %v239, 0
          %349 = vmatpush.msra.mxu0 0.0
          %350 = vmatpush.msra.mxu0 0.0
          %351 = vmatpush.msra.mxu0 0.0
          %352 = vmatpush.msra.mxu0 0.0
          %353 = vmatpush.msra.mxu0 0.0
          %354 = vmatpush.msra.mxu0 0.0
          %355 = vmatpush.msra.mxu0 0.0
          %356 = vmatpush.msra.mxu0 0.0
          %357 = vmatpush.msra.mxu0 %v247
          %358 = vmatpush.msra.mxu0 %v246
          %359 = vmatpush.msra.mxu0 %v245
          %360 = vmatpush.msra.mxu0 %v244
          %361 = vmatpush.msra.mxu0 %v243
          %362 = vmatpush.msra.mxu0 %v242
          %363 = vmatpush.msra.mxu0 %v241
          %364 = vmatpush.msra.mxu0 %v240
          %365 = vmatmul.f32.gmra.mxu0 %v254
          %v366 = vpop.f32.mrf.mxu0
          %v367 = vadd.f32 %v250, %v366
          %368 = vmatmul.f32.gmra.mxu0 %v257
          %v369 = vpop.f32.mrf.mxu0
          %v370 = vadd.f32 %v250, %v369
          %371 = vmatmul.f32.gmra.mxu0 %v260
          %v372 = vpop.f32.mrf.mxu0
          %v373 = vadd.f32 %v250, %v372
          %374 = vmatmul.f32.gmra.mxu0 %v263
          %v375 = vpop.f32.mrf.mxu0
          %v376 = vadd.f32 %v250, %v375
          %377 = vmatmul.f32.gmra.mxu0 %v266
          %v378 = vpop.f32.mrf.mxu0
          %v379 = vadd.f32 %v250, %v378
          %380 = vmatmul.f32.gmra.mxu0 %v269
          %v381 = vpop.f32.mrf.mxu0
          %v382 = vadd.f32 %v250, %v381
          %383 = vmatmul.f32.gmra.mxu0 %v272
          %v384 = vpop.f32.mrf.mxu0
          %v385 = vadd.f32 %v250, %v384
          %386 = vmatmul.f32.gmra.mxu0 %v275
          %v387 = vpop.f32.mrf.mxu0
          %v388 = vadd.f32 %v250, %v387
          %389 = vmatmul.f32.gmra.mxu0 %v278
          %v390 = vpop.f32.mrf.mxu0
          %v391 = vadd.f32 %v250, %v390
          %392 = vmatmul.f32.gmra.mxu0 %v281
          %v393 = vpop.f32.mrf.mxu0
          %v394 = vadd.f32 %v250, %v393
          %395 = vmatmul.f32.gmra.mxu0 %v284
          %v396 = vpop.f32.mrf.mxu0
          %v397 = vadd.f32 %v250, %v396
          %398 = vmatmul.f32.gmra.mxu0 %v287
          %v399 = vpop.f32.mrf.mxu0
          %v400 = vadd.f32 %v250, %v399
          %401 = vmatmul.f32.gmra.mxu0 %v290
          %v402 = vpop.f32.mrf.mxu0
          %v403 = vadd.f32 %v250, %v402
          %404 = vmatmul.f32.gmra.mxu0 %v293
          %v405 = vpop.f32.mrf.mxu0
          %v406 = vadd.f32 %v250, %v405
          %407 = vmatmul.f32.gmra.mxu0 %v296
          %v408 = vpop.f32.mrf.mxu0
          %v409 = vadd.f32 %v250, %v408
          %410 = vmatmul.f32.gmra.mxu0 %v299
          %v411 = vpop.f32.mrf.mxu0
          %v412 = vadd.f32 %v250, %v411
          %413 = vmatmul.f32.gmra.mxu0 %v302
          %v414 = vpop.f32.mrf.mxu0
          %v415 = vadd.f32 %v250, %v414
          %416 = vmatmul.f32.gmra.mxu0 %v305
          %v417 = vpop.f32.mrf.mxu0
          %v418 = vadd.f32 %v250, %v417
          %419 = vmatmul.f32.gmra.mxu0 %v308
          %v420 = vpop.f32.mrf.mxu0
          %v421 = vadd.f32 %v250, %v420
          %422 = vmatmul.f32.gmra.mxu0 %v311
          %v423 = vpop.f32.mrf.mxu0
          %v424 = vadd.f32 %v250, %v423
          %425 = vmatmul.f32.gmra.mxu0 %v314
          %v426 = vpop.f32.mrf.mxu0
          %v427 = vadd.f32 %v250, %v426
          %428 = vmatmul.f32.gmra.mxu0 %v317
          %v429 = vpop.f32.mrf.mxu0
          %v430 = vadd.f32 %v250, %v429
          %431 = vmatmul.f32.gmra.mxu0 %v320
          %v432 = vpop.f32.mrf.mxu0
          %v433 = vadd.f32 %v250, %v432
          %434 = vmatmul.f32.gmra.mxu0 %v323
          %v435 = vpop.f32.mrf.mxu0
          %v436 = vadd.f32 %v250, %v435
          %437 = vmatmul.f32.gmra.mxu0 %v326
          %v438 = vpop.f32.mrf.mxu0
          %v439 = vadd.f32 %v250, %v438
          %440 = vmatmul.f32.gmra.mxu0 %v329
          %v441 = vpop.f32.mrf.mxu0
          %v442 = vadd.f32 %v250, %v441
          %443 = vmatmul.f32.gmra.mxu0 %v332
          %v444 = vpop.f32.mrf.mxu0
          %v445 = vadd.f32 %v250, %v444
          %446 = vmatmul.f32.gmra.mxu0 %v335
          %v447 = vpop.f32.mrf.mxu0
          %v448 = vadd.f32 %v250, %v447
          %449 = vmatmul.f32.gmra.mxu0 %v338
          %v450 = vpop.f32.mrf.mxu0
          %v451 = vadd.f32 %v250, %v450
          %452 = vmatmul.f32.gmra.mxu0 %v341
          %v453 = vpop.f32.mrf.mxu0
          %v454 = vadd.f32 %v250, %v453
          %455 = vmatmul.f32.gmra.mxu0 %v344
          %v456 = vpop.f32.mrf.mxu0
          %v457 = vadd.f32 %v250, %v456
          %458 = vmatmul.f32.gmra.mxu0 %v347
          %v459 = vpop.f32.mrf.mxu0
          %v460 = vadd.f32 %v250, %v459
          %461 = vdwg.mxu0
          %v462 = vmax.f32 %v367, 0.0
          %v463 = vmax.f32 %v370, 0.0
          %v464 = vmax.f32 %v373, 0.0
          %v465 = vmax.f32 %v376, 0.0
          %v466 = vmax.f32 %v379, 0.0
          %v467 = vmax.f32 %v382, 0.0
          %v468 = vmax.f32 %v385, 0.0
          %v469 = vmax.f32 %v388, 0.0
          %v470 = vmax.f32 %v391, 0.0
          %v471 = vmax.f32 %v394, 0.0
          %v472 = vmax.f32 %v397, 0.0
          %v473 = vmax.f32 %v400, 0.0
          %v474 = vmax.f32 %v403, 0.0
          %v475 = vmax.f32 %v406, 0.0
          %v476 = vmax.f32 %v409, 0.0
          %v477 = vmax.f32 %v412, 0.0
          %v478 = vmax.f32 %v415, 0.0
          %v479 = vmax.f32 %v418, 0.0
          %v480 = vmax.f32 %v421, 0.0
          %v481 = vmax.f32 %v424, 0.0
          %v482 = vmax.f32 %v427, 0.0
          %v483 = vmax.f32 %v430, 0.0
          %v484 = vmax.f32 %v433, 0.0
          %v485 = vmax.f32 %v436, 0.0
          %v486 = vmax.f32 %v439, 0.0
          %v487 = vmax.f32 %v442, 0.0
          %v488 = vmax.f32 %v445, 0.0
          %v489 = vmax.f32 %v448, 0.0
          %v490 = vmax.f32 %v451, 0.0
          %v491 = vmax.f32 %v454, 0.0
          %v492 = vmax.f32 %v457, 0.0
          %v493 = vmax.f32 %v460, 0.0
          %v494 = vld [vmem:[%s3] sm:$0xff]
          %v495 = vld [vmem:[%s3 + $0x8] sm:$0xff]
          %v496 = vld [vmem:[%s3 + $0x10] sm:$0xff]
          %v497 = vld [vmem:[%s3 + $0x18] sm:$0xff]
          %v498 = vld [vmem:[%s3 + $0x20] sm:$0xff]
          %v499 = vld [vmem:[%s3 + $0x28] sm:$0xff]
          %v500 = vld [vmem:[%s3 + $0x30] sm:$0xff]
          %v501 = vld [vmem:[%s3 + $0x38] sm:$0xff]
          %v502 = vld [vmem:[%s3 + $0x40] sm:$0xff]
          %v503 = vld [vmem:[%s3 + $0x48] sm:$0xff]
          %v504 = vld [vmem:[%s3 + $0x50] sm:$0xff]
          %v505 = vld [vmem:[%s3 + $0x58] sm:$0xff]
          %v506 = vld [vmem:[%s3 + $0x60] sm:$0xff]
          %v507 = vld [vmem:[%s3 + $0x68] sm:$0xff]
          %v508 = vld [vmem:[%s3 + $0x70] sm:$0xff]
          %v509 = vld [vmem:[%s3 + $0x78] sm:$0xff]
          %v510 = vld [vmem:[%s4] sm:$0x1]
          %v512 = vperm.slane %v510, 0
          %514 = vmatpush.msra.mxu0 %v509
          %515 = vmatpush.msra.mxu0 %v508
          %516 = vmatpush.msra.mxu0 %v507
          %517 = vmatpush.msra.mxu0 %v506
          %518 = vmatpush.msra.mxu0 %v505
          %519 = vmatpush.msra.mxu0 %v504
          %520 = vmatpush.msra.mxu0 %v503
          %521 = vmatpush.msra.mxu0 %v502
          %522 = vmatpush.msra.mxu0 %v501
          %523 = vmatpush.msra.mxu0 %v500
          %524 = vmatpush.msra.mxu0 %v499
          %525 = vmatpush.msra.mxu0 %v498
          %526 = vmatpush.msra.mxu0 %v497
          %527 = vmatpush.msra.mxu0 %v496
          %528 = vmatpush.msra.mxu0 %v495
          %529 = vmatpush.msra.mxu0 %v494
          %530 = vmatmul.f32.gmra.mxu0 %v462
          %v531 = vpop.f32.mrf.mxu0
          %v532 = vadd.f32 %v512, %v531
          %533 = vmatmul.f32.gmra.mxu0 %v463
          %v534 = vpop.f32.mrf.mxu0
          %v535 = vadd.f32 %v512, %v534
          %536 = vmatmul.f32.gmra.mxu0 %v464
          %v537 = vpop.f32.mrf.mxu0
          %v538 = vadd.f32 %v512, %v537
          %539 = vmatmul.f32.gmra.mxu0 %v465
          %v540 = vpop.f32.mrf.mxu0
          %v541 = vadd.f32 %v512, %v540
          %542 = vmatmul.f32.gmra.mxu0 %v466
          %v543 = vpop.f32.mrf.mxu0
          %v544 = vadd.f32 %v512, %v543
          %545 = vmatmul.f32.gmra.mxu0 %v467
          %v546 = vpop.f32.mrf.mxu0
          %v547 = vadd.f32 %v512, %v546
          %548 = vmatmul.f32.gmra.mxu0 %v468
          %v549 = vpop.f32.mrf.mxu0
          %v550 = vadd.f32 %v512, %v549
          %551 = vmatmul.f32.gmra.mxu0 %v469
          %v552 = vpop.f32.mrf.mxu0
          %v553 = vadd.f32 %v512, %v552
          %554 = vmatmul.f32.gmra.mxu0 %v470
          %v555 = vpop.f32.mrf.mxu0
          %v556 = vadd.f32 %v512, %v555
          %557 = vmatmul.f32.gmra.mxu0 %v471
          %v558 = vpop.f32.mrf.mxu0
          %v559 = vadd.f32 %v512, %v558
          %560 = vmatmul.f32.gmra.mxu0 %v472
          %v561 = vpop.f32.mrf.mxu0
          %v562 = vadd.f32 %v512, %v561
          %563 = vmatmul.f32.gmra.mxu0 %v473
          %v564 = vpop.f32.mrf.mxu0
          %v565 = vadd.f32 %v512, %v564
          %566 = vmatmul.f32.gmra.mxu0 %v474
          %v567 = vpop.f32.mrf.mxu0
          %v568 = vadd.f32 %v512, %v567
          %569 = vmatmul.f32.gmra.mxu0 %v475
          %v570 = vpop.f32.mrf.mxu0
          %v571 = vadd.f32 %v512, %v570
          %572 = vmatmul.f32.gmra.mxu0 %v476
          %v573 = vpop.f32.mrf.mxu0
          %v574 = vadd.f32 %v512, %v573
          %575 = vmatmul.f32.gmra.mxu0 %v477
          %v576 = vpop.f32.mrf.mxu0
          %v577 = vadd.f32 %v512, %v576
          %578 = vmatmul.f32.gmra.mxu0 %v478
          %v579 = vpop.f32.mrf.mxu0
          %v580 = vadd.f32 %v512, %v579
          %581 = vmatmul.f32.gmra.mxu0 %v479
          %v582 = vpop.f32.mrf.mxu0
          %v583 = vadd.f32 %v512, %v582
          %584 = vmatmul.f32.gmra.mxu0 %v480
          %v585 = vpop.f32.mrf.mxu0
          %v586 = vadd.f32 %v512, %v585
          %587 = vmatmul.f32.gmra.mxu0 %v481
          %v588 = vpop.f32.mrf.mxu0
          %v589 = vadd.f32 %v512, %v588
          %590 = vmatmul.f32.gmra.mxu0 %v482
          %v591 = vpop.f32.mrf.mxu0
          %v592 = vadd.f32 %v512, %v591
          %593 = vmatmul.f32.gmra.mxu0 %v483
          %v594 = vpop.f32.mrf.mxu0
          %v595 = vadd.f32 %v512, %v594
          %596 = vmatmul.f32.gmra.mxu0 %v484
          %v597 = vpop.f32.mrf.mxu0
          %v598 = vadd.f32 %v512, %v597
          %599 = vmatmul.f32.gmra.mxu0 %v485
          %v600 = vpop.f32.mrf.mxu0
          %v601 = vadd.f32 %v512, %v600
          %602 = vmatmul.f32.gmra.mxu0 %v486
          %v603 = vpop.f32.mrf.mxu0
          %v604 = vadd.f32 %v512, %v603
          %605 = vmatmul.f32.gmra.mxu0 %v487
          %v606 = vpop.f32.mrf.mxu0
          %v607 = vadd.f32 %v512, %v606
          %608 = vmatmul.f32.gmra.mxu0 %v488
          %v609 = vpop.f32.mrf.mxu0
          %v610 = vadd.f32 %v512, %v609
          %611 = vmatmul.f32.gmra.mxu0 %v489
          %v612 = vpop.f32.mrf.mxu0
          %v613 = vadd.f32 %v512, %v612
          %614 = vmatmul.f32.gmra.mxu0 %v490
          %v615 = vpop.f32.mrf.mxu0
          %v616 = vadd.f32 %v512, %v615
          %617 = vmatmul.f32.gmra.mxu0 %v491
          %v618 = vpop.f32.mrf.mxu0
          %v619 = vadd.f32 %v512, %v618
          %620 = vmatmul.f32.gmra.mxu0 %v492
          %v621 = vpop.f32.mrf.mxu0
          %v622 = vadd.f32 %v512, %v621
          %623 = vmatmul.f32.gmra.mxu0 %v493
          %v624 = vpop.f32.mrf.mxu0
          %v625 = vadd.f32 %v512, %v624
          %626 = vdwg.mxu0
          %627 = vst.msk [vmem:[#allocation2] sm:$0xff] %vm252, %v532
          %628 = vst.msk [vmem:[#allocation2 + $0x8] sm:$0xff] %vm252, %v535
          %629 = vst.msk [vmem:[#allocation2 + $0x10] sm:$0xff] %vm252, %v538
          %630 = vst.msk [vmem:[#allocation2 + $0x18] sm:$0xff] %vm252, %v541
          %631 = vst.msk [vmem:[#allocation2 + $0x20] sm:$0xff] %vm252, %v544
          %632 = vst.msk [vmem:[#allocation2 + $0x28] sm:$0xff] %vm252, %v547
          %633 = vst.msk [vmem:[#allocation2 + $0x30] sm:$0xff] %vm252, %v550
          %634 = vst.msk [vmem:[#allocation2 + $0x38] sm:$0xff] %vm252, %v553
          %635 = vst.msk [vmem:[#allocation2 + $0x40] sm:$0xff] %vm252, %v556
          %636 = vst.msk [vmem:[#allocation2 + $0x48] sm:$0xff] %vm252, %v559
          %637 = vst.msk [vmem:[#allocation2 + $0x50] sm:$0xff] %vm252, %v562
          %638 = vst.msk [vmem:[#allocation2 + $0x58] sm:$0xff] %vm252, %v565
          %639 = vst.msk [vmem:[#allocation2 + $0x60] sm:$0xff] %vm252, %v568
          %640 = vst.msk [vmem:[#allocation2 + $0x68] sm:$0xff] %vm252, %v571
          %641 = vst.msk [vmem:[#allocation2 + $0x70] sm:$0xff] %vm252, %v574
          %642 = vst.msk [vmem:[#allocation2 + $0x78] sm:$0xff] %vm252, %v577
          %643 = vst.msk [vmem:[#allocation2 + $0x80] sm:$0xff] %vm252, %v580
          %644 = vst.msk [vmem:[#allocation2 + $0x88] sm:$0xff] %vm252, %v583
          %645 = vst.msk [vmem:[#allocation2 + $0x90] sm:$0xff] %vm252, %v586
          %646 = vst.msk [vmem:[#allocation2 + $0x98] sm:$0xff] %vm252, %v589
          %647 = vst.msk [vmem:[#allocation2 + $0xa0] sm:$0xff] %vm252, %v592
          %648 = vst.msk [vmem:[#allocation2 + $0xa8] sm:$0xff] %vm252, %v595
          %649 = vst.msk [vmem:[#allocation2 + $0xb0] sm:$0xff] %vm252, %v598
          %650 = vst.msk [vmem:[#allocation2 + $0xb8] sm:$0xff] %vm252, %v601
          %651 = vst.msk [vmem:[#allocation2 + $0xc0] sm:$0xff] %vm252, %v604
          %652 = vst.msk [vmem:[#allocation2 + $0xc8] sm:$0xff] %vm252, %v607
          %653 = vst.msk [vmem:[#allocation2 + $0xd0] sm:$0xff] %vm252, %v610
          %654 = vst.msk [vmem:[#allocation2 + $0xd8] sm:$0xff] %vm252, %v613
          %655 = vst.msk [vmem:[#allocation2 + $0xe0] sm:$0xff] %vm252, %v616
          %656 = vst.msk [vmem:[#allocation2 + $0xe8] sm:$0xff] %vm252, %v619
          %657 = vst.msk [vmem:[#allocation2 + $0xf0] sm:$0xff] %vm252, %v622
          %658 = vst.msk [vmem:[#allocation2 + $0xf8] sm:$0xff] %vm252, %v625
        $region44: #{tpu_custom_call.1} parent=39 // pred_fallthru
          _
        %s659 = smul.u32 %s19, 128
        %s660 = scalar_lea.vmem [#allocation2], %s659
        %v661 = vld [vmem:[%s660] sm:$0xff]
        %v662 = vld [vmem:[%s660 + $0x8] sm:$0xff]
        %v663 = vld [vmem:[%s660 + $0x10] sm:$0xff]
        %v664 = vld [vmem:[%s660 + $0x18] sm:$0xff]
        %v665 = vld [vmem:[%s660 + $0x20] sm:$0xff]
        %v666 = vld [vmem:[%s660 + $0x28] sm:$0xff]
        %v667 = vld [vmem:[%s660 + $0x30] sm:$0xff]
        %v668 = vld [vmem:[%s660 + $0x38] sm:$0xff]
        %v669 = vld [vmem:[%s660 + $0x40] sm:$0xff]
        %v670 = vld [vmem:[%s660 + $0x48] sm:$0xff]
        %v671 = vld [vmem:[%s660 + $0x50] sm:$0xff]
        %v672 = vld [vmem:[%s660 + $0x58] sm:$0xff]
        %v673 = vld [vmem:[%s660 + $0x60] sm:$0xff]
        %v674 = vld [vmem:[%s660 + $0x68] sm:$0xff]
        %v675 = vld [vmem:[%s660 + $0x70] sm:$0xff]
        %v676 = vld [vmem:[%s660 + $0x78] sm:$0xff]
        %v677 = vld [vmem:[#allocation2] sm:$0xff]
        %v678 = vld [vmem:[#allocation2 + $0x8] sm:$0xff]
        %v679 = vld [vmem:[#allocation2 + $0x10] sm:$0xff]
        %v680 = vld [vmem:[#allocation2 + $0x18] sm:$0xff]
        %v681 = vld [vmem:[#allocation2 + $0x20] sm:$0xff]
        %v682 = vld [vmem:[#allocation2 + $0x28] sm:$0xff]
        %v683 = vld [vmem:[#allocation2 + $0x30] sm:$0xff]
        %v684 = vld [vmem:[#allocation2 + $0x38] sm:$0xff]
        %v685 = vld [vmem:[#allocation2 + $0x40] sm:$0xff]
        %v686 = vld [vmem:[#allocation2 + $0x48] sm:$0xff]
        %v687 = vld [vmem:[#allocation2 + $0x50] sm:$0xff]
        %v688 = vld [vmem:[#allocation2 + $0x58] sm:$0xff]
        %v689 = vld [vmem:[#allocation2 + $0x60] sm:$0xff]
        %v690 = vld [vmem:[#allocation2 + $0x68] sm:$0xff]
        %v691 = vld [vmem:[#allocation2 + $0x70] sm:$0xff]
        %v692 = vld [vmem:[#allocation2 + $0x78] sm:$0xff]
        %v693 = vld [vmem:[#allocation2 + $0x80] sm:$0xff]
        %v694 = vld [vmem:[#allocation2 + $0x88] sm:$0xff]
        %v695 = vld [vmem:[#allocation2 + $0x90] sm:$0xff]
        %v696 = vld [vmem:[#allocation2 + $0x98] sm:$0xff]
        %v697 = vld [vmem:[#allocation2 + $0xa0] sm:$0xff]
        %v698 = vld [vmem:[#allocation2 + $0xa8] sm:$0xff]
        %v699 = vld [vmem:[#allocation2 + $0xb0] sm:$0xff]
        %v700 = vld [vmem:[#allocation2 + $0xb8] sm:$0xff]
        %v701 = vld [vmem:[#allocation2 + $0xc0] sm:$0xff]
        %v702 = vld [vmem:[#allocation2 + $0xc8] sm:$0xff]
        %v703 = vld [vmem:[#allocation2 + $0xd0] sm:$0xff]
        %v704 = vld [vmem:[#allocation2 + $0xd8] sm:$0xff]
        %v705 = vld [vmem:[#allocation2 + $0xe0] sm:$0xff]
        %v706 = vld [vmem:[#allocation2 + $0xe8] sm:$0xff]
        %v707 = vld [vmem:[#allocation2 + $0xf0] sm:$0xff]
        %v708 = vld [vmem:[#allocation2 + $0xf8] sm:$0xff]
        %vm709 = vcmask 523264
        %v711 = vsel %vm709, %v661, 0
        %v714 = vsel %vm709, %v662, 0
        %v717 = vsel %vm709, %v663, 0
        %v720 = vsel %vm709, %v664, 0
        %v723 = vsel %vm709, %v665, 0
        %v726 = vsel %vm709, %v666, 0
        %v729 = vsel %vm709, %v667, 0
        %v732 = vsel %vm709, %v668, 0
        %v735 = vsel %vm709, %v669, 0
        %v738 = vsel %vm709, %v670, 0
        %v741 = vsel %vm709, %v671, 0
        %v744 = vsel %vm709, %v672, 0
        %v747 = vsel %vm709, %v673, 0
        %v750 = vsel %vm709, %v674, 0
        %v753 = vsel %vm709, %v675, 0
        %v756 = vsel %vm709, %v676, 0
        %v759 = vsel %vm709, %v677, 0
        %v762 = vsel %vm709, %v678, 0
        %v765 = vsel %vm709, %v679, 0
        %v768 = vsel %vm709, %v680, 0
        %v771 = vsel %vm709, %v681, 0
        %v774 = vsel %vm709, %v682, 0
        %v777 = vsel %vm709, %v683, 0
        %v780 = vsel %vm709, %v684, 0
        %v783 = vsel %vm709, %v685, 0
        %v786 = vsel %vm709, %v686, 0
        %v789 = vsel %vm709, %v687, 0
        %v792 = vsel %vm709, %v688, 0
        %v795 = vsel %vm709, %v689, 0
        %v798 = vsel %vm709, %v690, 0
        %v801 = vsel %vm709, %v691, 0
        %v804 = vsel %vm709, %v692, 0
        %v807 = vsel %vm709, %v693, 0
        %v810 = vsel %vm709, %v694, 0
        %v813 = vsel %vm709, %v695, 0
        %v816 = vsel %vm709, %v696, 0
        %v819 = vsel %vm709, %v697, 0
        %v822 = vsel %vm709, %v698, 0
        %v825 = vsel %vm709, %v699, 0
        %v828 = vsel %vm709, %v700, 0
        %v831 = vsel %vm709, %v701, 0
        %v834 = vsel %vm709, %v702, 0
        %v837 = vsel %vm709, %v703, 0
        %v840 = vsel %vm709, %v704, 0
        %v843 = vsel %vm709, %v705, 0
        %v846 = vsel %vm709, %v706, 0
        %v849 = vsel %vm709, %v707, 0
        %v852 = vsel %vm709, %v708, 0
        %854 = vmatpush.xpose.msra.mxu0 %v804
        %855 = vmatpush.xpose.msra.mxu0 %v801
        %856 = vmatpush.xpose.msra.mxu0 %v798
        %857 = vmatpush.xpose.msra.mxu0 %v795
        %858 = vmatpush.xpose.msra.mxu0 %v792
        %859 = vmatpush.xpose.msra.mxu0 %v789
        %860 = vmatpush.xpose.msra.mxu0 %v786
        %861 = vmatpush.xpose.msra.mxu0 %v783
        %862 = vmatpush.xpose.msra.mxu0 %v780
        %863 = vmatpush.xpose.msra.mxu0 %v777
        %864 = vmatpush.xpose.msra.mxu0 %v774
        %865 = vmatpush.xpose.msra.mxu0 %v771
        %866 = vmatpush.xpose.msra.mxu0 %v768
        %867 = vmatpush.xpose.msra.mxu0 %v765
        %868 = vmatpush.xpose.msra.mxu0 %v762
        %869 = vmatpush.xpose.msra.mxu0 %v759
        %870 = vmatmul.f32.gmra.mxu0 %v711
        %v871 = vpop.f32.mrf.mxu0
        %v872 = vadd.f32 0.0, %v871
        %873 = vmatmul.f32.gmra.mxu0 %v714
        %v874 = vpop.f32.mrf.mxu0
        %v875 = vadd.f32 0.0, %v874
        %876 = vmatmul.f32.gmra.mxu0 %v717
        %v877 = vpop.f32.mrf.mxu0
        %v878 = vadd.f32 0.0, %v877
        %879 = vmatmul.f32.gmra.mxu0 %v720
        %v880 = vpop.f32.mrf.mxu0
        %v881 = vadd.f32 0.0, %v880
        %882 = vmatmul.f32.gmra.mxu0 %v723
        %v883 = vpop.f32.mrf.mxu0
        %v884 = vadd.f32 0.0, %v883
        %885 = vmatmul.f32.gmra.mxu0 %v726
        %v886 = vpop.f32.mrf.mxu0
        %v887 = vadd.f32 0.0, %v886
        %888 = vmatmul.f32.gmra.mxu0 %v729
        %v889 = vpop.f32.mrf.mxu0
        %v890 = vadd.f32 0.0, %v889
        %891 = vmatmul.f32.gmra.mxu0 %v732
        %v892 = vpop.f32.mrf.mxu0
        %v893 = vadd.f32 0.0, %v892
        %894 = vmatmul.f32.gmra.mxu0 %v735
        %v895 = vpop.f32.mrf.mxu0
        %v896 = vadd.f32 0.0, %v895
        %897 = vmatmul.f32.gmra.mxu0 %v738
        %v898 = vpop.f32.mrf.mxu0
        %v899 = vadd.f32 0.0, %v898
        %900 = vmatmul.f32.gmra.mxu0 %v741
        %v901 = vpop.f32.mrf.mxu0
        %v902 = vadd.f32 0.0, %v901
        %903 = vmatmul.f32.gmra.mxu0 %v744
        %v904 = vpop.f32.mrf.mxu0
        %v905 = vadd.f32 0.0, %v904
        %906 = vmatmul.f32.gmra.mxu0 %v747
        %v907 = vpop.f32.mrf.mxu0
        %v908 = vadd.f32 0.0, %v907
        %909 = vmatmul.f32.gmra.mxu0 %v750
        %v910 = vpop.f32.mrf.mxu0
        %v911 = vadd.f32 0.0, %v910
        %912 = vmatmul.f32.gmra.mxu0 %v753
        %v913 = vpop.f32.mrf.mxu0
        %v914 = vadd.f32 0.0, %v913
        %915 = vmatmul.f32.gmra.mxu0 %v756
        %v916 = vpop.f32.mrf.mxu0
        %v917 = vadd.f32 0.0, %v916
        %918 = vdwg.mxu0
        %919 = vmatpush.xpose.msra.mxu0 %v852
        %920 = vmatpush.xpose.msra.mxu0 %v849
        %921 = vmatpush.xpose.msra.mxu0 %v846
        %922 = vmatpush.xpose.msra.mxu0 %v843
        %923 = vmatpush.xpose.msra.mxu0 %v840
        %924 = vmatpush.xpose.msra.mxu0 %v837
        %925 = vmatpush.xpose.msra.mxu0 %v834
        %926 = vmatpush.xpose.msra.mxu0 %v831
        %927 = vmatpush.xpose.msra.mxu0 %v828
        %928 = vmatpush.xpose.msra.mxu0 %v825
        %929 = vmatpush.xpose.msra.mxu0 %v822
        %930 = vmatpush.xpose.msra.mxu0 %v819
        %931 = vmatpush.xpose.msra.mxu0 %v816
        %932 = vmatpush.xpose.msra.mxu0 %v813
        %933 = vmatpush.xpose.msra.mxu0 %v810
        %934 = vmatpush.xpose.msra.mxu0 %v807
        %935 = vmatmul.f32.gmra.mxu0 %v711
        %v936 = vpop.f32.mrf.mxu0
        %v937 = vadd.f32 0.0, %v936
        %938 = vmatmul.f32.gmra.mxu0 %v714
        %v939 = vpop.f32.mrf.mxu0
        %v940 = vadd.f32 0.0, %v939
        %941 = vmatmul.f32.gmra.mxu0 %v717
        %v942 = vpop.f32.mrf.mxu0
        %v943 = vadd.f32 0.0, %v942
        %944 = vmatmul.f32.gmra.mxu0 %v720
        %v945 = vpop.f32.mrf.mxu0
        %v946 = vadd.f32 0.0, %v945
        %947 = vmatmul.f32.gmra.mxu0 %v723
        %v948 = vpop.f32.mrf.mxu0
        %v949 = vadd.f32 0.0, %v948
        %950 = vmatmul.f32.gmra.mxu0 %v726
        %v951 = vpop.f32.mrf.mxu0
        %v952 = vadd.f32 0.0, %v951
        %953 = vmatmul.f32.gmra.mxu0 %v729
        %v954 = vpop.f32.mrf.mxu0
        %v955 = vadd.f32 0.0, %v954
        %956 = vmatmul.f32.gmra.mxu0 %v732
        %v957 = vpop.f32.mrf.mxu0
        %v958 = vadd.f32 0.0, %v957
        %959 = vmatmul.f32.gmra.mxu0 %v735
        %v960 = vpop.f32.mrf.mxu0
        %v961 = vadd.f32 0.0, %v960
        %962 = vmatmul.f32.gmra.mxu0 %v738
        %v963 = vpop.f32.mrf.mxu0
        %v964 = vadd.f32 0.0, %v963
        %965 = vmatmul.f32.gmra.mxu0 %v741
        %v966 = vpop.f32.mrf.mxu0
        %v967 = vadd.f32 0.0, %v966
        %968 = vmatmul.f32.gmra.mxu0 %v744
        %v969 = vpop.f32.mrf.mxu0
        %v970 = vadd.f32 0.0, %v969
        %971 = vmatmul.f32.gmra.mxu0 %v747
        %v972 = vpop.f32.mrf.mxu0
        %v973 = vadd.f32 0.0, %v972
        %974 = vmatmul.f32.gmra.mxu0 %v750
        %v975 = vpop.f32.mrf.mxu0
        %v976 = vadd.f32 0.0, %v975
        %977 = vmatmul.f32.gmra.mxu0 %v753
        %v978 = vpop.f32.mrf.mxu0
        %v979 = vadd.f32 0.0, %v978
        %980 = vmatmul.f32.gmra.mxu0 %v756
        %v981 = vpop.f32.mrf.mxu0
        %v982 = vadd.f32 0.0, %v981
        %983 = vdwg.mxu0
        %v984 = vmax.f32 %v872, %v937
        %985 = vmax.xlane.f32.xlu0 %v984
        %v986 = vpop.xlane.xlu0 %985
        %v987 = vmax.f32 %v875, %v940
        %988 = vmax.xlane.f32.xlu0 %v987
        %v989 = vpop.xlane.xlu0 %988
        %v990 = vmax.f32 %v878, %v943
        %991 = vmax.xlane.f32.xlu0 %v990
        %v992 = vpop.xlane.xlu0 %991
        %v993 = vmax.f32 %v881, %v946
        %994 = vmax.xlane.f32.xlu0 %v993
        %v995 = vpop.xlane.xlu0 %994
        %v996 = vmax.f32 %v884, %v949
        %997 = vmax.xlane.f32.xlu0 %v996
        %v998 = vpop.xlane.xlu0 %997
        %v999 = vmax.f32 %v887, %v952
        %1000 = vmax.xlane.f32.xlu0 %v999
        %v1001 = vpop.xlane.xlu0 %1000
        %v1002 = vmax.f32 %v890, %v955
        %1003 = vmax.xlane.f32.xlu0 %v1002
        %v1004 = vpop.xlane.xlu0 %1003
        %v1005 = vmax.f32 %v893, %v958
        %1006 = vmax.xlane.f32.xlu0 %v1005
        %v1007 = vpop.xlane.xlu0 %1006
        %v1008 = vmax.f32 %v896, %v961
        %1009 = vmax.xlane.f32.xlu0 %v1008
        %v1010 = vpop.xlane.xlu0 %1009
        %v1011 = vmax.f32 %v899, %v964
        %1012 = vmax.xlane.f32.xlu0 %v1011
        %v1013 = vpop.xlane.xlu0 %1012
        %v1014 = vmax.f32 %v902, %v967
        %1015 = vmax.xlane.f32.xlu0 %v1014
        %v1016 = vpop.xlane.xlu0 %1015
        %v1017 = vmax.f32 %v905, %v970
        %1018 = vmax.xlane.f32.xlu0 %v1017
        %v1019 = vpop.xlane.xlu0 %1018
        %v1020 = vmax.f32 %v908, %v973
        %1021 = vmax.xlane.f32.xlu0 %v1020
        %v1022 = vpop.xlane.xlu0 %1021
        %v1023 = vmax.f32 %v911, %v976
        %1024 = vmax.xlane.f32.xlu0 %v1023
        %v1025 = vpop.xlane.xlu0 %1024
        %v1026 = vmax.f32 %v914, %v979
        %1027 = vmax.xlane.f32.xlu0 %v1026
        %v1028 = vpop.xlane.xlu0 %1027
        %v1029 = vmax.f32 %v917, %v982
        %1030 = vmax.xlane.f32.xlu0 %v1029
        %v1031 = vpop.xlane.xlu0 %1030
        %v1032 = vsub.f32 %v872, %v986
        %v1033 = vsub.f32 %v937, %v986
        %v1034 = vsub.f32 %v875, %v989
        %v1035 = vsub.f32 %v940, %v989
        %v1036 = vsub.f32 %v878, %v992
        %v1037 = vsub.f32 %v943, %v992
        %v1038 = vsub.f32 %v881, %v995
        %v1039 = vsub.f32 %v946, %v995
        %v1040 = vsub.f32 %v884, %v998
        %v1041 = vsub.f32 %v949, %v998
        %v1042 = vsub.f32 %v887, %v1001
        %v1043 = vsub.f32 %v952, %v1001
        %v1044 = vsub.f32 %v890, %v1004
        %v1045 = vsub.f32 %v955, %v1004
        %v1046 = vsub.f32 %v893, %v1007
        %v1047 = vsub.f32 %v958, %v1007
        %v1048 = vsub.f32 %v896, %v1010
        %v1049 = vsub.f32 %v961, %v1010
        %v1050 = vsub.f32 %v899, %v1013
        %v1051 = vsub.f32 %v964, %v1013
        %v1052 = vsub.f32 %v902, %v1016
        %v1053 = vsub.f32 %v967, %v1016
        %v1054 = vsub.f32 %v905, %v1019
        %v1055 = vsub.f32 %v970, %v1019
        %v1056 = vsub.f32 %v908, %v1022
        %v1057 = vsub.f32 %v973, %v1022
        %v1058 = vsub.f32 %v911, %v1025
        %v1059 = vsub.f32 %v976, %v1025
        %v1060 = vsub.f32 %v914, %v1028
        %v1061 = vsub.f32 %v979, %v1028
        %v1062 = vsub.f32 %v917, %v1031
        %v1063 = vsub.f32 %v982, %v1031
        %v1064 = vmul.f32 %v1032, 1.442695
        %v1065 = vpow.pop %v1064
        %v1066 = vmul.f32 %v1033, 1.442695
        %v1067 = vpow.pop %v1066
        %v1068 = vmul.f32 %v1034, 1.442695
        %v1069 = vpow.pop %v1068
        %v1070 = vmul.f32 %v1035, 1.442695
        %v1071 = vpow.pop %v1070
        %v1072 = vmul.f32 %v1036, 1.442695
        %v1073 = vpow.pop %v1072
        %v1074 = vmul.f32 %v1037, 1.442695
        %v1075 = vpow.pop %v1074
        %v1076 = vmul.f32 %v1038, 1.442695
        %v1077 = vpow.pop %v1076
        %v1078 = vmul.f32 %v1039, 1.442695
        %v1079 = vpow.pop %v1078
        %v1080 = vmul.f32 %v1040, 1.442695
        %v1081 = vpow.pop %v1080
        %v1082 = vmul.f32 %v1041, 1.442695
        %v1083 = vpow.pop %v1082
        %v1084 = vmul.f32 %v1042, 1.442695
        %v1085 = vpow.pop %v1084
        %v1086 = vmul.f32 %v1043, 1.442695
        %v1087 = vpow.pop %v1086
        %v1088 = vmul.f32 %v1044, 1.442695
        %v1089 = vpow.pop %v1088
        %v1090 = vmul.f32 %v1045, 1.442695
        %v1091 = vpow.pop %v1090
        %v1092 = vmul.f32 %v1046, 1.442695
        %v1093 = vpow.pop %v1092
        %v1094 = vmul.f32 %v1047, 1.442695
        %v1095 = vpow.pop %v1094
        %v1096 = vmul.f32 %v1048, 1.442695
        %v1097 = vpow.pop %v1096
        %v1098 = vmul.f32 %v1049, 1.442695
        %v1099 = vpow.pop %v1098
        %v1100 = vmul.f32 %v1050, 1.442695
        %v1101 = vpow.pop %v1100
        %v1102 = vmul.f32 %v1051, 1.442695
        %v1103 = vpow.pop %v1102
        %v1104 = vmul.f32 %v1052, 1.442695
        %v1105 = vpow.pop %v1104
        %v1106 = vmul.f32 %v1053, 1.442695
        %v1107 = vpow.pop %v1106
        %v1108 = vmul.f32 %v1054, 1.442695
        %v1109 = vpow.pop %v1108
        %v1110 = vmul.f32 %v1055, 1.442695
        %v1111 = vpow.pop %v1110
        %v1112 = vmul.f32 %v1056, 1.442695
        %v1113 = vpow.pop %v1112
        %v1114 = vmul.f32 %v1057, 1.442695
        %v1115 = vpow.pop %v1114
        %v1116 = vmul.f32 %v1058, 1.442695
        %v1117 = vpow.pop %v1116
        %v1118 = vmul.f32 %v1059, 1.442695
        %v1119 = vpow.pop %v1118
        %v1120 = vmul.f32 %v1060, 1.442695
        %v1121 = vpow.pop %v1120
        %v1122 = vmul.f32 %v1061, 1.442695
        %v1123 = vpow.pop %v1122
        %v1124 = vmul.f32 %v1062, 1.442695
        %v1125 = vpow.pop %v1124
        %v1126 = vmul.f32 %v1063, 1.442695
        %v1127 = vpow.pop %v1126
        %v1128 = vadd.f32 %v1065, %v1067
        %1129 = vadd.xlane.f32.xlu0 %v1128
        %v1130 = vpop.xlane.xlu0 %1129
        %v1131 = vadd.f32 %v1069, %v1071
        %1132 = vadd.xlane.f32.xlu0 %v1131
        %v1133 = vpop.xlane.xlu0 %1132
        %v1134 = vadd.f32 %v1073, %v1075
        %1135 = vadd.xlane.f32.xlu0 %v1134
        %v1136 = vpop.xlane.xlu0 %1135
        %v1137 = vadd.f32 %v1077, %v1079
        %1138 = vadd.xlane.f32.xlu0 %v1137
        %v1139 = vpop.xlane.xlu0 %1138
        %v1140 = vadd.f32 %v1081, %v1083
        %1141 = vadd.xlane.f32.xlu0 %v1140
        %v1142 = vpop.xlane.xlu0 %1141
        %v1143 = vadd.f32 %v1085, %v1087
        %1144 = vadd.xlane.f32.xlu0 %v1143
        %v1145 = vpop.xlane.xlu0 %1144
        %v1146 = vadd.f32 %v1089, %v1091
        %1147 = vadd.xlane.f32.xlu0 %v1146
        %v1148 = vpop.xlane.xlu0 %1147
        %v1149 = vadd.f32 %v1093, %v1095
        %1150 = vadd.xlane.f32.xlu0 %v1149
        %v1151 = vpop.xlane.xlu0 %1150
        %v1152 = vadd.f32 %v1097, %v1099
        %1153 = vadd.xlane.f32.xlu0 %v1152
        %v1154 = vpop.xlane.xlu0 %1153
        %v1155 = vadd.f32 %v1101, %v1103
        %1156 = vadd.xlane.f32.xlu0 %v1155
        %v1157 = vpop.xlane.xlu0 %1156
        %v1158 = vadd.f32 %v1105, %v1107
        %1159 = vadd.xlane.f32.xlu0 %v1158
        %v1160 = vpop.xlane.xlu0 %1159
        %v1161 = vadd.f32 %v1109, %v1111
        %1162 = vadd.xlane.f32.xlu0 %v1161
        %v1163 = vpop.xlane.xlu0 %1162
        %v1164 = vadd.f32 %v1113, %v1115
        %1165 = vadd.xlane.f32.xlu0 %v1164
        %v1166 = vpop.xlane.xlu0 %1165
        %v1167 = vadd.f32 %v1117, %v1119
        %1168 = vadd.xlane.f32.xlu0 %v1167
        %v1169 = vpop.xlane.xlu0 %1168
        %v1170 = vadd.f32 %v1121, %v1123
        %1171 = vadd.xlane.f32.xlu0 %v1170
        %v1172 = vpop.xlane.xlu0 %1171
        %v1173 = vadd.f32 %v1125, %v1127
        %1174 = vadd.xlane.f32.xlu0 %v1173
        %v1175 = vpop.xlane.xlu0 %1174
        %v1176 = vrcp.pop %v1130
        %v1177 = vmul.f32 %v1130, %v1176
        %v1178 = vsub.f32 1.0, %v1177
        %v1179 = vmul.f32 %v1176, %v1178
        %v1180 = vadd.f32 %v1176, %v1179
        %vm1181 = vweird.f32 %v1130
        %vm1182 = vweird.f32 %v1176
        %vm1183 = vmor %vm1181, %vm1182
        %v1184 = vsel %vm1183, %v1176, %v1180
        %v1185 = vand.u32 2147483647, %v1130
        %vm1186 = vcmp.eq.f32.partialorder %v1185, 8.507059e+37
        %v1187 = vand.u32 %v1130, 2147483648
        %v1188 = vor.u32 1.1754944e-38, %v1187
        %v1189 = vsel %vm1186, %v1188, %v1184
        %v1190 = vmul.f32 %v1065, %v1189
        %v1191 = vmul.f32 %v1067, %v1189
        %v1192 = vrcp.pop %v1133
        %v1193 = vmul.f32 %v1133, %v1192
        %v1194 = vsub.f32 1.0, %v1193
        %v1195 = vmul.f32 %v1192, %v1194
        %v1196 = vadd.f32 %v1192, %v1195
        %vm1197 = vweird.f32 %v1133
        %vm1198 = vweird.f32 %v1192
        %vm1199 = vmor %vm1197, %vm1198
        %v1200 = vsel %vm1199, %v1192, %v1196
        %v1201 = vand.u32 2147483647, %v1133
        %vm1202 = vcmp.eq.f32.partialorder %v1201, 8.507059e+37
        %v1203 = vand.u32 %v1133, 2147483648
        %v1204 = vor.u32 1.1754944e-38, %v1203
        %v1205 = vsel %vm1202, %v1204, %v1200
        %v1206 = vmul.f32 %v1069, %v1205
        %v1207 = vmul.f32 %v1071, %v1205
        %v1208 = vrcp.pop %v1136
        %v1209 = vmul.f32 %v1136, %v1208
        %v1210 = vsub.f32 1.0, %v1209
        %v1211 = vmul.f32 %v1208, %v1210
        %v1212 = vadd.f32 %v1208, %v1211
        %vm1213 = vweird.f32 %v1136
        %vm1214 = vweird.f32 %v1208
        %vm1215 = vmor %vm1213, %vm1214
        %v1216 = vsel %vm1215, %v1208, %v1212
        %v1217 = vand.u32 2147483647, %v1136
        %vm1218 = vcmp.eq.f32.partialorder %v1217, 8.507059e+37
        %v1219 = vand.u32 %v1136, 2147483648
        %v1220 = vor.u32 1.1754944e-38, %v1219
        %v1221 = vsel %vm1218, %v1220, %v1216
        %v1222 = vmul.f32 %v1073, %v1221
        %v1223 = vmul.f32 %v1075, %v1221
        %v1224 = vrcp.pop %v1139
        %v1225 = vmul.f32 %v1139, %v1224
        %v1226 = vsub.f32 1.0, %v1225
        %v1227 = vmul.f32 %v1224, %v1226
        %v1228 = vadd.f32 %v1224, %v1227
        %vm1229 = vweird.f32 %v1139
        %vm1230 = vweird.f32 %v1224
        %vm1231 = vmor %vm1229, %vm1230
        %v1232 = vsel %vm1231, %v1224, %v1228
        %v1233 = vand.u32 2147483647, %v1139
        %vm1234 = vcmp.eq.f32.partialorder %v1233, 8.507059e+37
        %v1235 = vand.u32 %v1139, 2147483648
        %v1236 = vor.u32 1.1754944e-38, %v1235
        %v1237 = vsel %vm1234, %v1236, %v1232
        %v1238 = vmul.f32 %v1077, %v1237
        %v1239 = vmul.f32 %v1079, %v1237
        %v1240 = vrcp.pop %v1142
        %v1241 = vmul.f32 %v1142, %v1240
        %v1242 = vsub.f32 1.0, %v1241
        %v1243 = vmul.f32 %v1240, %v1242
        %v1244 = vadd.f32 %v1240, %v1243
        %vm1245 = vweird.f32 %v1142
        %vm1246 = vweird.f32 %v1240
        %vm1247 = vmor %vm1245, %vm1246
        %v1248 = vsel %vm1247, %v1240, %v1244
        %v1249 = vand.u32 2147483647, %v1142
        %vm1250 = vcmp.eq.f32.partialorder %v1249, 8.507059e+37
        %v1251 = vand.u32 %v1142, 2147483648
        %v1252 = vor.u32 1.1754944e-38, %v1251
        %v1253 = vsel %vm1250, %v1252, %v1248
        %v1254 = vmul.f32 %v1081, %v1253
        %v1255 = vmul.f32 %v1083, %v1253
        %v1256 = vrcp.pop %v1145
        %v1257 = vmul.f32 %v1145, %v1256
        %v1258 = vsub.f32 1.0, %v1257
        %v1259 = vmul.f32 %v1256, %v1258
        %v1260 = vadd.f32 %v1256, %v1259
        %vm1261 = vweird.f32 %v1145
        %vm1262 = vweird.f32 %v1256
        %vm1263 = vmor %vm1261, %vm1262
        %v1264 = vsel %vm1263, %v1256, %v1260
        %v1265 = vand.u32 2147483647, %v1145
        %vm1266 = vcmp.eq.f32.partialorder %v1265, 8.507059e+37
        %v1267 = vand.u32 %v1145, 2147483648
        %v1268 = vor.u32 1.1754944e-38, %v1267
        %v1269 = vsel %vm1266, %v1268, %v1264
        %v1270 = vmul.f32 %v1085, %v1269
        %v1271 = vmul.f32 %v1087, %v1269
        %v1272 = vrcp.pop %v1148
        %v1273 = vmul.f32 %v1148, %v1272
        %v1274 = vsub.f32 1.0, %v1273
        %v1275 = vmul.f32 %v1272, %v1274
        %v1276 = vadd.f32 %v1272, %v1275
        %vm1277 = vweird.f32 %v1148
        %vm1278 = vweird.f32 %v1272
        %vm1279 = vmor %vm1277, %vm1278
        %v1280 = vsel %vm1279, %v1272, %v1276
        %v1281 = vand.u32 2147483647, %v1148
        %vm1282 = vcmp.eq.f32.partialorder %v1281, 8.507059e+37
        %v1283 = vand.u32 %v1148, 2147483648
        %v1284 = vor.u32 1.1754944e-38, %v1283
        %v1285 = vsel %vm1282, %v1284, %v1280
        %v1286 = vmul.f32 %v1089, %v1285
        %v1287 = vmul.f32 %v1091, %v1285
        %v1288 = vrcp.pop %v1151
        %v1289 = vmul.f32 %v1151, %v1288
        %v1290 = vsub.f32 1.0, %v1289
        %v1291 = vmul.f32 %v1288, %v1290
        %v1292 = vadd.f32 %v1288, %v1291
        %vm1293 = vweird.f32 %v1151
        %vm1294 = vweird.f32 %v1288
        %vm1295 = vmor %vm1293, %vm1294
        %v1296 = vsel %vm1295, %v1288, %v1292
        %v1297 = vand.u32 2147483647, %v1151
        %vm1298 = vcmp.eq.f32.partialorder %v1297, 8.507059e+37
        %v1299 = vand.u32 %v1151, 2147483648
        %v1300 = vor.u32 1.1754944e-38, %v1299
        %v1301 = vsel %vm1298, %v1300, %v1296
        %v1302 = vmul.f32 %v1093, %v1301
        %v1303 = vmul.f32 %v1095, %v1301
        %v1304 = vrcp.pop %v1154
        %v1305 = vmul.f32 %v1154, %v1304
        %v1306 = vsub.f32 1.0, %v1305
        %v1307 = vmul.f32 %v1304, %v1306
        %v1308 = vadd.f32 %v1304, %v1307
        %vm1309 = vweird.f32 %v1154
        %vm1310 = vweird.f32 %v1304
        %vm1311 = vmor %vm1309, %vm1310
        %v1312 = vsel %vm1311, %v1304, %v1308
        %v1313 = vand.u32 2147483647, %v1154
        %vm1314 = vcmp.eq.f32.partialorder %v1313, 8.507059e+37
        %v1315 = vand.u32 %v1154, 2147483648
        %v1316 = vor.u32 1.1754944e-38, %v1315
        %v1317 = vsel %vm1314, %v1316, %v1312
        %v1318 = vmul.f32 %v1097, %v1317
        %v1319 = vmul.f32 %v1099, %v1317
        %v1320 = vrcp.pop %v1157
        %v1321 = vmul.f32 %v1157, %v1320
        %v1322 = vsub.f32 1.0, %v1321
        %v1323 = vmul.f32 %v1320, %v1322
        %v1324 = vadd.f32 %v1320, %v1323
        %vm1325 = vweird.f32 %v1157
        %vm1326 = vweird.f32 %v1320
        %vm1327 = vmor %vm1325, %vm1326
        %v1328 = vsel %vm1327, %v1320, %v1324
        %v1329 = vand.u32 2147483647, %v1157
        %vm1330 = vcmp.eq.f32.partialorder %v1329, 8.507059e+37
        %v1331 = vand.u32 %v1157, 2147483648
        %v1332 = vor.u32 1.1754944e-38, %v1331
        %v1333 = vsel %vm1330, %v1332, %v1328
        %v1334 = vmul.f32 %v1101, %v1333
        %v1335 = vmul.f32 %v1103, %v1333
        %v1336 = vrcp.pop %v1160
        %v1337 = vmul.f32 %v1160, %v1336
        %v1338 = vsub.f32 1.0, %v1337
        %v1339 = vmul.f32 %v1336, %v1338
        %v1340 = vadd.f32 %v1336, %v1339
        %vm1341 = vweird.f32 %v1160
        %vm1342 = vweird.f32 %v1336
        %vm1343 = vmor %vm1341, %vm1342
        %v1344 = vsel %vm1343, %v1336, %v1340
        %v1345 = vand.u32 2147483647, %v1160
        %vm1346 = vcmp.eq.f32.partialorder %v1345, 8.507059e+37
        %v1347 = vand.u32 %v1160, 2147483648
        %v1348 = vor.u32 1.1754944e-38, %v1347
        %v1349 = vsel %vm1346, %v1348, %v1344
        %v1350 = vmul.f32 %v1105, %v1349
        %v1351 = vmul.f32 %v1107, %v1349
        %v1352 = vrcp.pop %v1163
        %v1353 = vmul.f32 %v1163, %v1352
        %v1354 = vsub.f32 1.0, %v1353
        %v1355 = vmul.f32 %v1352, %v1354
        %v1356 = vadd.f32 %v1352, %v1355
        %vm1357 = vweird.f32 %v1163
        %vm1358 = vweird.f32 %v1352
        %vm1359 = vmor %vm1357, %vm1358
        %v1360 = vsel %vm1359, %v1352, %v1356
        %v1361 = vand.u32 2147483647, %v1163
        %vm1362 = vcmp.eq.f32.partialorder %v1361, 8.507059e+37
        %v1363 = vand.u32 %v1163, 2147483648
        %v1364 = vor.u32 1.1754944e-38, %v1363
        %v1365 = vsel %vm1362, %v1364, %v1360
        %v1366 = vmul.f32 %v1109, %v1365
        %v1367 = vmul.f32 %v1111, %v1365
        %v1368 = vrcp.pop %v1166
        %v1369 = vmul.f32 %v1166, %v1368
        %v1370 = vsub.f32 1.0, %v1369
        %v1371 = vmul.f32 %v1368, %v1370
        %v1372 = vadd.f32 %v1368, %v1371
        %vm1373 = vweird.f32 %v1166
        %vm1374 = vweird.f32 %v1368
        %vm1375 = vmor %vm1373, %vm1374
        %v1376 = vsel %vm1375, %v1368, %v1372
        %v1377 = vand.u32 2147483647, %v1166
        %vm1378 = vcmp.eq.f32.partialorder %v1377, 8.507059e+37
        %v1379 = vand.u32 %v1166, 2147483648
        %v1380 = vor.u32 1.1754944e-38, %v1379
        %v1381 = vsel %vm1378, %v1380, %v1376
        %v1382 = vmul.f32 %v1113, %v1381
        %v1383 = vmul.f32 %v1115, %v1381
        %v1384 = vrcp.pop %v1169
        %v1385 = vmul.f32 %v1169, %v1384
        %v1386 = vsub.f32 1.0, %v1385
        %v1387 = vmul.f32 %v1384, %v1386
        %v1388 = vadd.f32 %v1384, %v1387
        %vm1389 = vweird.f32 %v1169
        %vm1390 = vweird.f32 %v1384
        %vm1391 = vmor %vm1389, %vm1390
        %v1392 = vsel %vm1391, %v1384, %v1388
        %v1393 = vand.u32 2147483647, %v1169
        %vm1394 = vcmp.eq.f32.partialorder %v1393, 8.507059e+37
        %v1395 = vand.u32 %v1169, 2147483648
        %v1396 = vor.u32 1.1754944e-38, %v1395
        %v1397 = vsel %vm1394, %v1396, %v1392
        %v1398 = vmul.f32 %v1117, %v1397
        %v1399 = vmul.f32 %v1119, %v1397
        %v1400 = vrcp.pop %v1172
        %v1401 = vmul.f32 %v1172, %v1400
        %v1402 = vsub.f32 1.0, %v1401
        %v1403 = vmul.f32 %v1400, %v1402
        %v1404 = vadd.f32 %v1400, %v1403
        %vm1405 = vweird.f32 %v1172
        %vm1406 = vweird.f32 %v1400
        %vm1407 = vmor %vm1405, %vm1406
        %v1408 = vsel %vm1407, %v1400, %v1404
        %v1409 = vand.u32 2147483647, %v1172
        %vm1410 = vcmp.eq.f32.partialorder %v1409, 8.507059e+37
        %v1411 = vand.u32 %v1172, 2147483648
        %v1412 = vor.u32 1.1754944e-38, %v1411
        %v1413 = vsel %vm1410, %v1412, %v1408
        %v1414 = vmul.f32 %v1121, %v1413
        %v1415 = vmul.f32 %v1123, %v1413
        %v1416 = vrcp.pop %v1175
        %v1417 = vmul.f32 %v1175, %v1416
        %v1418 = vsub.f32 1.0, %v1417
        %v1419 = vmul.f32 %v1416, %v1418
        %v1420 = vadd.f32 %v1416, %v1419
        %vm1421 = vweird.f32 %v1175
        %vm1422 = vweird.f32 %v1416
        %vm1423 = vmor %vm1421, %vm1422
        %v1424 = vsel %vm1423, %v1416, %v1420
        %v1425 = vand.u32 2147483647, %v1175
        %vm1426 = vcmp.eq.f32.partialorder %v1425, 8.507059e+37
        %v1427 = vand.u32 %v1175, 2147483648
        %v1428 = vor.u32 1.1754944e-38, %v1427
        %v1429 = vsel %vm1426, %v1428, %v1424
        %v1430 = vmul.f32 %v1125, %v1429
        %v1431 = vmul.f32 %v1127, %v1429
        %1432 = vst [vmem:[%s202] sm:$0xff] %v1190
        %1433 = vst [vmem:[%s202 + $0x8] sm:$0xff] %v1191
        %1434 = vst [vmem:[%s202 + $0x10] sm:$0xff] %v1206
        %1435 = vst [vmem:[%s202 + $0x18] sm:$0xff] %v1207
        %1436 = vst [vmem:[%s202 + $0x20] sm:$0xff] %v1222
        %1437 = vst [vmem:[%s202 + $0x28] sm:$0xff] %v1223
        %1438 = vst [vmem:[%s202 + $0x30] sm:$0xff] %v1238
        %1439 = vst [vmem:[%s202 + $0x38] sm:$0xff] %v1239
        %1440 = vst [vmem:[%s202 + $0x40] sm:$0xff] %v1254
        %1441 = vst [vmem:[%s202 + $0x48] sm:$0xff] %v1255
        %1442 = vst [vmem:[%s202 + $0x50] sm:$0xff] %v1270
        %1443 = vst [vmem:[%s202 + $0x58] sm:$0xff] %v1271
        %1444 = vst [vmem:[%s202 + $0x60] sm:$0xff] %v1286
        %1445 = vst [vmem:[%s202 + $0x68] sm:$0xff] %v1287
        %1446 = vst [vmem:[%s202 + $0x70] sm:$0xff] %v1302
        %1447 = vst [vmem:[%s202 + $0x78] sm:$0xff] %v1303
        %1448 = vst [vmem:[%s202 + $0x80] sm:$0xff] %v1318
        %1449 = vst [vmem:[%s202 + $0x88] sm:$0xff] %v1319
        %1450 = vst [vmem:[%s202 + $0x90] sm:$0xff] %v1334
        %1451 = vst [vmem:[%s202 + $0x98] sm:$0xff] %v1335
        %1452 = vst [vmem:[%s202 + $0xa0] sm:$0xff] %v1350
        %1453 = vst [vmem:[%s202 + $0xa8] sm:$0xff] %v1351
        %1454 = vst [vmem:[%s202 + $0xb0] sm:$0xff] %v1366
        %1455 = vst [vmem:[%s202 + $0xb8] sm:$0xff] %v1367
        %1456 = vst [vmem:[%s202 + $0xc0] sm:$0xff] %v1382
        %1457 = vst [vmem:[%s202 + $0xc8] sm:$0xff] %v1383
        %1458 = vst [vmem:[%s202 + $0xd0] sm:$0xff] %v1398
        %1459 = vst [vmem:[%s202 + $0xd8] sm:$0xff] %v1399
        %1460 = vst [vmem:[%s202 + $0xe0] sm:$0xff] %v1414
        %1461 = vst [vmem:[%s202 + $0xe8] sm:$0xff] %v1415
        %1462 = vst [vmem:[%s202 + $0xf0] sm:$0xff] %v1430
        %1463 = vst [vmem:[%s202 + $0xf8] sm:$0xff] %v1431
        %s1464 = sand.u32 %s132, 1
        %s1465 = scalar_lea.sflag [#allocation4], %s1464
        %s1466 = sand.u32 %s132, 1
        %s1467 = smul.addr %s1466, 256
        %s1468 = scalar_lea.vmem [#allocation3], %s1467
        // Predicated region
        $region45: #{tpu_custom_call.1} parent=39 // pred_check
          %p1469 = pneg %p142
        $region46: #{tpu_custom_call.1} parent=39 // pred_check_branch
          %1471 = sbr.rel (%p1469) target = $region48
        $region47: #{tpu_custom_call.1} parent=39 // pred_region
          %s1472 = smul.u32 16, %s19
          %1474 = vsyncadd %s1465, 0
          %s1475 = smul.addr %s1472, 2
          %s1476 = smul.addr %s1475, 8
          %s1477 = scalar_lea.hbm %s5, %s1476
          %s1478 = sshll.u32 %s1468, 4
          %s1479 = int_to_ptr.vmem [resolvable:$true] %s1478
          %s1480 = sshll.u32 %s1477, 4
          %s1481 = int_to_ptr.hbm [resolvable:$true] %s1480
          %1486 = dma.vmem_to_hbm [thread:$0]  %s1479, 4096, %s1481, %s1465, 256, 256, 16
        $region48: #{tpu_custom_call.1} parent=39 // pred_fallthru
          _
      $region40: #{tpu_custom_call.1} parent=5 // pred_fallthru
        _
      %p1487 = scmp.le.s32.totalorder 2, %s14
      // Predicated region
      $region49: #{tpu_custom_call.1} parent=5 // pred_check
        %p1488 = pneg %p1487
      $region50: #{tpu_custom_call.1} parent=5 // pred_check_branch
        %1490 = sbr.rel (%p1488) target = $region52
      $region51: #{tpu_custom_call.1} parent=5 // pred_region
        %s1491 = ssub.s32 %s14, 2
        // Predicated region
        $region53: #{tpu_custom_call.1} parent=51 // pred_check
          %p1492 = pneg %p148
        $region54: #{tpu_custom_call.1} parent=51 // pred_check_branch
          %1494 = sbr.rel (%p1492) target = $region56
        $region55: #{tpu_custom_call.1} parent=51 // pred_region
          %s1495 = sand.u32 %s133, 1
          %s1496 = scalar_lea.sflag [#allocation4], %s1495
          %s1497 = sand.u32 %s133, 1
          %s1498 = smul.addr %s1497, 256
          %s1499 = scalar_lea.vmem [#allocation3], %s1498
          %1501 = dma.done %s1496, 4096
        $region56: #{tpu_custom_call.1} parent=51 // pred_fallthru
          _
      $region52: #{tpu_custom_call.1} parent=5 // pred_fallthru
        _
    $region6: #{tpu_custom_call.1} parent=1 // loop_footer
      %s18 = sadd.s32 1, %s14
    $region7: #{tpu_custom_call.1} parent=1 // loop_footer_branch
      %13 = sbr.rel target = $region3
    $region8: #{tpu_custom_call.1} parent=1 // loop_exit
      _
    %1502 = vsyncpa [#allocation4], 1
    %s1503 = scalar_lea.sflag [#allocation4], 1
    %1504 = vsyncpa %s1503, 1

</llo_original>
